<compile_context>
chip_gen: v6e
topology: v6e:2x2x1
jax: 0.10.0
libtpu: 0.0.40
codegen_flags: <defaults>
</compile_context>

<pallas_src>
import functools

import jax
import jax.numpy as jnp
from jax.experimental import pallas as pl
from jax.experimental.pallas import tpu as pltpu


def _dwconv1d_kernel(x_ref, w_ref, o_ref, *scratch, k_size, padding, l_out):
    # x_ref : (Rt, L)            input row tile (rows = flattened B*C)
    # w_ref : (Rt, K)            per-row depthwise taps
    # o_ref : (Rt, L_out)        output row tile
    # scratch[0] (only if padding > 0): (Rt, L + 2*padding) staging buffer
    rt, l_in = x_ref.shape

    if padding > 0:
        pad_ref = scratch[0]
        # Zero-padded working row built in VMEM (replaces the HBM-side
        # jnp.pad of the previous version).  The pad strips are rewritten
        # every grid step, so no cross-step / cross-core state is assumed.
        strip = jnp.zeros((rt, padding), pad_ref.dtype)
        pad_ref[:, :padding] = strip
        pad_ref[:, padding + l_in:] = strip
        pad_ref[:, padding:padding + l_in] = x_ref[...]
        src = pad_ref
    else:
        src = x_ref

    # Hoist the per-tap weight columns out of the MAC loop (f32, (Rt, 1)).
    # The lane-broadcast inside the multiply is a replicated-layout op, so no
    # full-width weight operands are materialized.
    w = w_ref[...].astype(jnp.float32)
    w_cols = [w[:, k:k + 1] for k in range(k_size)]

    # K shifted multiply-accumulates on the VPU.  Each tap is a lane-offset
    # load from the VMEM staging buffer, cast to f32 as it is consumed (keeps
    # vreg pressure down for sub-32-bit inputs), accumulated in vregs, and
    # stored exactly once.
    acc = src[:, 0:l_out].astype(jnp.float32) * w_cols[0]
    for k in range(1, k_size):
        acc = acc + src[:, k:k + l_out].astype(jnp.float32) * w_cols[k]

    o_ref[...] = acc.astype(o_ref.dtype)


def _round_up(n, m):
    return ((n + m - 1) // m) * m


def _pick_row_tile(rows, requested=None):
    """Row tile: multiple of 8 (sublane rule) or the full row extent."""
    if requested is None:
        if rows <= 8:
            return rows
        # Aim for >= 2 row tiles (megacore on v7x), cap block size for VMEM.
        requested = min(256, pl.cdiv(rows, 2))
    rt = _round_up(requested, 8)
    if rt >= rows:
        return rows            # single full-extent block (always legal)
    return rt                  # multiple of 8; last block may be partial


def depthwise_conv1d(x, weight, padding=0, row_tile=None):
    """Depthwise Conv1d matching nn.Conv1d(ch, ch, k, padding=padding, groups=ch, bias=False).

    x:      (B, C, L)
    weight: (C, 1, K) (PyTorch depthwise layout) or (C, K)
    returns (B, C, L + 2*padding - K + 1)
    """
    if weight.ndim == 3:
        weight = weight[:, 0, :]                     # (C, K)
    B, C, L = x.shape
    K = weight.shape[-1]
    assert weight.shape[0] == C, "weight channel dim must match x"
    L_out = L + 2 * padding - K + 1
    assert L_out > 0, "output length must be positive"

    rows = B * C
    x2d = x.reshape(rows, L)                         # free reshape (merge B, C)
    w2d = jnp.tile(weight, (B, 1))                   # (B*C, K), tiny

    rt = _pick_row_tile(rows, row_tile)
    grid = (pl.cdiv(rows, rt),)
    w_len = L + 2 * padding

    kernel = functools.partial(
        _dwconv1d_kernel, k_size=K, padding=padding, l_out=L_out)

    scratch_shapes = []
    if padding > 0:
        scratch_shapes.append(pltpu.VMEM((rt, w_len), x.dtype))

    itemsize = x.dtype.itemsize
    # Double-buffered in/out/weight blocks + staging scratch + f32 accumulator
    # and a couple of live operands, plus headroom.  Capped at 64 MiB so the
    # same setting is valid on v7x (64 MiB/TC) as well as v5e/v6e.
    vmem_bytes = 2 * rt * (L + L_out + K) * itemsize
    vmem_bytes += rt * w_len * itemsize
    vmem_bytes += 4 * rt * max(L_out, 128) * 4
    vmem_limit = int(min(max(vmem_bytes + (4 << 20), 16 << 20), 64 << 20))

    cost = pl.CostEstimate(
        flops=2 * rows * K * L_out,
        transcendentals=0,
        bytes_accessed=(rows * L * itemsize            # input read
                        + rows * L_out * itemsize      # output write
                        + rows * K * weight.dtype.itemsize))

    out2d = pl.pallas_call(
        kernel,
        out_shape=jax.ShapeDtypeStruct((rows, L_out), x.dtype),
        grid_spec=pltpu.PrefetchScalarGridSpec(
            num_scalar_prefetch=0,
            grid=grid,
            in_specs=[
                pl.BlockSpec((rt, L), lambda r: (r, 0)),      # full L on lanes
                pl.BlockSpec((rt, K), lambda r: (r, 0)),      # per-row taps
            ],
            out_specs=pl.BlockSpec((rt, L_out), lambda r: (r, 0)),
            scratch_shapes=scratch_shapes,
        ),
        compiler_params=pltpu.CompilerParams(
            dimension_semantics=("parallel",),
            vmem_limit_bytes=vmem_limit,
        ),
        cost_estimate=cost,
    )(x2d, w2d)

    return out2d.reshape(B, C, L_out)


def _reference_depthwise_conv1d(x, weight, padding=0):
    """Pure-JAX reference (explicit sum) for correctness checking."""
    if weight.ndim == 3:
        weight = weight[:, 0, :]
    B, C, L = x.shape
    K = weight.shape[-1]
    L_out = L + 2 * padding - K + 1
    x_pad = jnp.pad(x, ((0, 0), (0, 0), (padding, padding)))
    out = jnp.zeros((B, C, L_out), jnp.float32)
    for k in range(K):
        out = out + (x_pad[:, :, k:k + L_out].astype(jnp.float32)
                     * weight[:, k][None, :, None])
    return out.astype(x.dtype)


if __name__ == "__main__":
    key = jax.random.PRNGKey(0)

    def _init_weight(k, C, K):
        # Mimics nn.Conv1d default init: U(-1/sqrt(fan_in), 1/sqrt(fan_in)).
        bound = 1.0 / (1 * K) ** 0.5
        return jax.random.uniform(k, (C, 1, K), dtype=jnp.float32,
                                  minval=-bound, maxval=bound)

    checks = [
        # (B, C, L, K, padding, row_tile)
        (2, 4, 16, 5, 2, None),   # canonical small case, "same" padding
        (2, 4, 16, 3, 0, None),   # module default padding=0 (valid conv)
        (5, 4, 16, 5, 2, 8),      # multi row-tile grid with a partial last tile
    ]
    for idx, (B, C, L, K, PAD, RT) in enumerate(checks):
        kx, kw, key = jax.random.split(key, 3)
        x = jax.random.normal(kx, (B, C, L), dtype=jnp.float32)
        w = _init_weight(kw, C, K)

        out = depthwise_conv1d(x, w, padding=PAD, row_tile=RT)
        out = jax.block_until_ready(out)

        ref = _reference_depthwise_conv1d(x, w, padding=PAD)
        assert out.shape == (B, C, L + 2 * PAD - K + 1), f"shape mismatch in check {idx}"
        assert jnp.allclose(out, ref, atol=1e-5, rtol=1e-5), f"value mismatch in check {idx}"

    print("KERNEL_OK")
</pallas_src>

<mosaic_0001>
module attributes {stable_mosaic.version = 11 : i64} {
  func.func @_dwconv1d_kernel(%arg0: i32, %arg1: memref<8x16xf32, #tpu.memory_space<vmem>>, %arg2: memref<8x5xf32, #tpu.memory_space<vmem>>, %arg3: memref<8x16xf32, #tpu.memory_space<vmem>>, %arg4: memref<8x20xf32, #tpu.memory_space<vmem>>) attributes {dimension_semantics = [#tpu.dimension_semantics<parallel>], iteration_bounds = array<i64: 1>, scalar_prefetch = 0 : i64, scratch_operands = 1 : i64, tpu.core_type = #tpu.core_type<tc>, window_params = [{transform_indices = @transform_0, window_bounds = array<i64: 8, 16>}, {transform_indices = @transform_1, window_bounds = array<i64: 8, 5>}, {transform_indices = @transform_2, window_bounds = array<i64: 8, 16>}]} {
    %cst = arith.constant 0.000000e+00 : f32
    %0 = vector.broadcast %cst : f32 to vector<8x2xf32>
    %c0 = arith.constant 0 : index
    %c0_0 = arith.constant 0 : index
    %1 = vector.load %arg4[%c0, %c0_0] : memref<8x20xf32, #tpu.memory_space<vmem>>, vector<8x2xf32>
    tpu.vector_store %arg4[%c0, %c0_0], %0 {strides = array<i32>} : memref<8x20xf32, #tpu.memory_space<vmem>>, vector<8x2xf32>,
    %c0_1 = arith.constant 0 : index
    %c18 = arith.constant 18 : index
    %2 = vector.load %arg4[%c0_1, %c18] : memref<8x20xf32, #tpu.memory_space<vmem>>, vector<8x2xf32>
    tpu.vector_store %arg4[%c0_1, %c18], %0 {strides = array<i32>} : memref<8x20xf32, #tpu.memory_space<vmem>>, vector<8x2xf32>,
    %c0_2 = arith.constant 0 : index
    %c0_3 = arith.constant 0 : index
    %3 = vector.load %arg1[%c0_2, %c0_3] : memref<8x16xf32, #tpu.memory_space<vmem>>, vector<8x16xf32>
    %c0_4 = arith.constant 0 : index
    %c2 = arith.constant 2 : index
    %4 = vector.load %arg4[%c0_4, %c2] : memref<8x20xf32, #tpu.memory_space<vmem>>, vector<8x16xf32>
    tpu.vector_store %arg4[%c0_4, %c2], %3 {strides = array<i32>} : memref<8x20xf32, #tpu.memory_space<vmem>>, vector<8x16xf32>,
    %c0_5 = arith.constant 0 : index
    %c0_6 = arith.constant 0 : index
    %5 = vector.load %arg2[%c0_5, %c0_6] : memref<8x5xf32, #tpu.memory_space<vmem>>, vector<8x5xf32>
    %6 = vector.extract_strided_slice %5 {offsets = [0, 0], sizes = [8, 1], strides = [1, 1]} : vector<8x5xf32> to vector<8x1xf32>
    %7 = vector.extract_strided_slice %5 {offsets = [0, 1], sizes = [8, 1], strides = [1, 1]} : vector<8x5xf32> to vector<8x1xf32>
    %8 = vector.extract_strided_slice %5 {offsets = [0, 2], sizes = [8, 1], strides = [1, 1]} : vector<8x5xf32> to vector<8x1xf32>
    %9 = vector.extract_strided_slice %5 {offsets = [0, 3], sizes = [8, 1], strides = [1, 1]} : vector<8x5xf32> to vector<8x1xf32>
    %10 = vector.extract_strided_slice %5 {offsets = [0, 4], sizes = [8, 1], strides = [1, 1]} : vector<8x5xf32> to vector<8x1xf32>
    %c0_7 = arith.constant 0 : index
    %c0_8 = arith.constant 0 : index
    %11 = vector.load %arg4[%c0_7, %c0_8] : memref<8x20xf32, #tpu.memory_space<vmem>>, vector<8x16xf32>
    %12 = vector.broadcast %6 : vector<8x1xf32> to vector<8x16xf32>
    %13 = arith.mulf %11, %12 : vector<8x16xf32>
    %c0_9 = arith.constant 0 : index
    %c1 = arith.constant 1 : index
    %14 = vector.load %arg4[%c0_9, %c1] : memref<8x20xf32, #tpu.memory_space<vmem>>, vector<8x16xf32>
    %15 = vector.broadcast %7 : vector<8x1xf32> to vector<8x16xf32>
    %16 = arith.mulf %14, %15 : vector<8x16xf32>
    %17 = arith.addf %13, %16 : vector<8x16xf32>
    %c0_10 = arith.constant 0 : index
    %c2_11 = arith.constant 2 : index
    %18 = vector.load %arg4[%c0_10, %c2_11] : memref<8x20xf32, #tpu.memory_space<vmem>>, vector<8x16xf32>
    %19 = vector.broadcast %8 : vector<8x1xf32> to vector<8x16xf32>
    %20 = arith.mulf %18, %19 : vector<8x16xf32>
    %21 = arith.addf %17, %20 : vector<8x16xf32>
    %c0_12 = arith.constant 0 : index
    %c3 = arith.constant 3 : index
    %22 = vector.load %arg4[%c0_12, %c3] : memref<8x20xf32, #tpu.memory_space<vmem>>, vector<8x16xf32>
    %23 = vector.broadcast %9 : vector<8x1xf32> to vector<8x16xf32>
    %24 = arith.mulf %22, %23 : vector<8x16xf32>
    %25 = arith.addf %21, %24 : vector<8x16xf32>
    %c0_13 = arith.constant 0 : index
    %c4 = arith.constant 4 : index
    %26 = vector.load %arg4[%c0_13, %c4] : memref<8x20xf32, #tpu.memory_space<vmem>>, vector<8x16xf32>
    %27 = vector.broadcast %10 : vector<8x1xf32> to vector<8x16xf32>
    %28 = arith.mulf %26, %27 : vector<8x16xf32>
    %29 = arith.addf %25, %28 : vector<8x16xf32>
    %c0_14 = arith.constant 0 : index
    %c0_15 = arith.constant 0 : index
    %30 = vector.load %arg3[%c0_14, %c0_15] : memref<8x16xf32, #tpu.memory_space<vmem>>, vector<8x16xf32>
    tpu.vector_store %arg3[%c0_14, %c0_15], %29 {strides = array<i32>} : memref<8x16xf32, #tpu.memory_space<vmem>>, vector<8x16xf32>,
    return
  }
  func.func @transform_0(%arg0: i32) -> (i32, i32) {
    %c0_i32 = arith.constant 0 : i32
    %c0_i32_0 = arith.constant 0 : i32
    return %arg0, %c0_i32 : i32, i32
  }
  func.func @transform_1(%arg0: i32) -> (i32, i32) {
    %c0_i32 = arith.constant 0 : i32
    %c0_i32_0 = arith.constant 0 : i32
    return %arg0, %c0_i32 : i32, i32
  }
  func.func @transform_2(%arg0: i32) -> (i32, i32) {
    %c0_i32 = arith.constant 0 : i32
    %c0_i32_0 = arith.constant 0 : i32
    return %arg0, %c0_i32 : i32, i32
  }
}

</mosaic_0001>

<llo_original>
// kernel: tpu_custom_call.1
$region0: #{tpu_custom_call.1}
  #allocation0 [shape = 'u32[]', space=smem, size = 0x4, offset = 0x4, fixed_abs, tag = 'smem constant byte address 0x4 - core index']
  #allocation1 [shape = 'u32[144,128]{1,0:T(1,128)}', space=vmem, size = 0x12000, scoped, tag = 'internal scratch']
  #allocation2 [shape = 'f32[8,20]{1,0:T(8,128)}', space=vmem, size = 0x1000, scoped, tag = 'scratch operand']
  %s0 = inlined_call_operand.hbm [shape: f32[8,16], index: 0, kind: input, shape index: {}]
  %s1 = inlined_call_operand.hbm [shape: f32[8,5], index: 1, kind: input, shape index: {}]
  %s2 = inlined_call_operand.hbm [shape: f32[8,16], index: 2, kind: output, shape index: {}]
  %s3 = sld [smem:[#allocation0]]
  $region26: #{tpu_custom_call.1} parent=0
    _
  %s5 = ssub.s32 1, %s3
  %s6 = scalar_select 0, %s5, %s3
  $region1: #{tpu_custom_call.1} parent=0
    #allocation3 [shape = 'u8[4096]{0}', space=vmem, size = 0x1000, scoped, tag = 'input window, operand 0, single buffered']
    #allocation4 [shape = 's32[1]{0}', space=sflag, size = 0x4, scoped, tag = 'scoped memory for tpu_custom_call.1']
    #allocation5 [shape = 's32[1]{0}', space=sflag, size = 0x4, scoped, tag = 'scoped memory for tpu_custom_call.1']
    #allocation6 [shape = 'u8[4096]{0}', space=vmem, size = 0x1000, scoped, tag = 'input window, operand 1, single buffered']
    #allocation7 [shape = 's32[1]{0}', space=sflag, size = 0x4, scoped, tag = 'scoped memory for tpu_custom_call.1']
    #allocation8 [shape = 'u8[4096]{0}', space=vmem, size = 0x1000, scoped, tag = 'output window, operand 0, single buffered']
    %7 = vsyncpa [#allocation4], 0
    %8 = vsyncpa [#allocation7], 0
    %9 = vsyncpa [#allocation5], 0
    // Predicated region
    $region2: #{tpu_custom_call.1} parent=1 // pred_check
      _
    $region3: #{tpu_custom_call.1} parent=1 // pred_check_branch
      %11 = sbr.rel (0) target = $region5
    $region4: #{tpu_custom_call.1} parent=1 // pred_region
      %s13 = ssub.s32 128, 128
      %14 = vsyncadd [#allocation4], %s13
      %s16 = sshll.u32 [#allocation3], 4
      %s17 = int_to_ptr.vmem [resolvable:$true] %s16
      %19 = dma.hbm_to_vmem [thread:$0]  %s0, 128, %s17, [#allocation4]
    $region5: #{tpu_custom_call.1} parent=1 // pred_fallthru
      _
    // Predicated region
    $region6: #{tpu_custom_call.1} parent=1 // pred_check
      _
    $region7: #{tpu_custom_call.1} parent=1 // pred_check_branch
      %21 = sbr.rel (0) target = $region9
    $region8: #{tpu_custom_call.1} parent=1 // pred_region
      %s23 = ssub.s32 128, 128
      %24 = vsyncadd [#allocation7], %s23
      %s26 = sshll.u32 [#allocation6], 4
      %s27 = int_to_ptr.vmem [resolvable:$true] %s26
      %29 = dma.hbm_to_vmem [thread:$0]  %s1, 128, %s27, [#allocation7]
    $region9: #{tpu_custom_call.1} parent=1 // pred_fallthru
      _
    // Predicated region
    $region10: #{tpu_custom_call.1} parent=1 // pred_check
      _
    $region11: #{tpu_custom_call.1} parent=1 // pred_check_branch
      %31 = sbr.rel (0) target = $region13
    $region12: #{tpu_custom_call.1} parent=1 // pred_region
      %32 = dma.done [#allocation4], 128
    $region13: #{tpu_custom_call.1} parent=1 // pred_fallthru
      _
    // Predicated region
    $region14: #{tpu_custom_call.1} parent=1 // pred_check
      _
    $region15: #{tpu_custom_call.1} parent=1 // pred_check_branch
      %34 = sbr.rel (0) target = $region17
    $region16: #{tpu_custom_call.1} parent=1 // pred_region
      %35 = dma.done [#allocation7], 128
    $region17: #{tpu_custom_call.1} parent=1 // pred_fallthru
      _
    %vm36 = vcmask 15360
    %37 = vst.msk [vmem:[#allocation2] sm:$0xff] %vm36, 0.0
    %vm38 = vcmask 162960
    %39 = vst.msk [vmem:[#allocation2] sm:$0xff] %vm38, 0.0
    %v40 = vld [vmem:[#allocation3] sm:$0xff]
    %42 = vrot.lane.b32.xlu0 %v40, 2
    %v43 = vpop.permute.xlu0 %42
    %vm45 = vcmask 146448
    %46 = vst.msk [vmem:[#allocation2] sm:$0xff] %vm45, %v43
    %v47 = vld [vmem:[#allocation6] sm:$0xff]
    %v48 = vld [vmem:[#allocation2] sm:$0xff]
    %50 = vset.pattern.permute.xlu0 0
    %51 = vperm.xlu0 %50, %v47
    %v52 = vpop.permute.xlu0 %51
    %v54 = vmul.f32 %v48, %v52
    %55 = vset.pattern.permute.xlu0 1
    %56 = vperm.xlu0 %55, %v47
    %v57 = vpop.permute.xlu0 %56
    %v59 = vmul.f32 %v48, %v57
    %61 = vrot.lane.b32.xlu0 %v59, 127
    %v62 = vpop.permute.xlu0 %61
    %v64 = vadd.f32 %v54, %v62
    %65 = vset.pattern.permute.xlu0 2
    %66 = vperm.xlu0 %65, %v47
    %v67 = vpop.permute.xlu0 %66
    %v69 = vmul.f32 %v48, %v67
    %71 = vrot.lane.b32.xlu0 %v69, 126
    %v72 = vpop.permute.xlu0 %71
    %v74 = vadd.f32 %v64, %v72
    %75 = vset.pattern.permute.xlu0 3
    %76 = vperm.xlu0 %75, %v47
    %v77 = vpop.permute.xlu0 %76
    %v79 = vmul.f32 %v48, %v77
    %81 = vrot.lane.b32.xlu0 %v79, 125
    %v82 = vpop.permute.xlu0 %81
    %v84 = vadd.f32 %v74, %v82
    %85 = vset.pattern.permute.xlu0 4
    %86 = vperm.xlu0 %85, %v47
    %v87 = vpop.permute.xlu0 %86
    %v89 = vmul.f32 %v48, %v87
    %91 = vrot.lane.b32.xlu0 %v89, 124
    %v92 = vpop.permute.xlu0 %91
    %v94 = vadd.f32 %v84, %v92
    %vm95 = vcmask 130048
    %96 = vst.msk [vmem:[#allocation8] sm:$0xff] %vm95, %v94
    // Predicated region
    $region18: #{tpu_custom_call.1} parent=1 // pred_check
      _
    $region19: #{tpu_custom_call.1} parent=1 // pred_check_branch
      %98 = sbr.rel (0) target = $region21
    $region20: #{tpu_custom_call.1} parent=1 // pred_region
      %s100 = ssub.s32 128, 128
      %101 = vsyncadd [#allocation5], %s100
      %s103 = sshll.u32 [#allocation8], 4
      %s104 = int_to_ptr.vmem [resolvable:$true] %s103
      %106 = dma.vmem_to_hbm [thread:$0]  %s104, 128, %s2, [#allocation5]
    $region21: #{tpu_custom_call.1} parent=1 // pred_fallthru
      _
    // Predicated region
    $region22: #{tpu_custom_call.1} parent=1 // pred_check
      _
    $region23: #{tpu_custom_call.1} parent=1 // pred_check_branch
      %108 = sbr.rel (0) target = $region25
    $region24: #{tpu_custom_call.1} parent=1 // pred_region
      %109 = dma.done [#allocation5], 128
    $region25: #{tpu_custom_call.1} parent=1 // pred_fallthru
      _
    %110 = vsyncpa [#allocation4], 1
    %111 = vsyncpa [#allocation7], 1
    %112 = vsyncpa [#allocation5], 1

</llo_original>
